<compile_context>
chip_gen: v6e
topology: v6e:2x2x1
jax: 0.10.0
libtpu: 0.0.40
codegen_flags: <defaults>
</compile_context>

<pallas_src>
import functools

import jax
import jax.numpy as jnp
from jax import lax
from jax.experimental import pallas as pl
from jax.experimental.pallas import tpu as pltpu


# ----------------------------------------------------------------------------
# Pass 1: per-row inverse L2 norms.
# ----------------------------------------------------------------------------
def _inv_norm_kernel(x_ref, inv_ref, *, eps):
    # x_ref: (1, TS, D) -> inv_ref: (1, TS, 1) f32
    x = x_ref[0].astype(jnp.float32)
    ssq = jnp.sum(x * x, axis=-1, keepdims=True)             # (TS, 1)
    # rsqrt(max(ssq, eps^2)) == 1 / max(||x||, eps): one EUP op, no divide.
    inv_ref[0] = lax.rsqrt(jnp.maximum(ssq, eps * eps))


def _inv_norms(x, eps, ts, vmem_limit):
    B, S, D = x.shape
    return pl.pallas_call(
        functools.partial(_inv_norm_kernel, eps=float(eps)),
        out_shape=jax.ShapeDtypeStruct((B, S, 1), jnp.float32),
        grid_spec=pltpu.PrefetchScalarGridSpec(
            num_scalar_prefetch=0,
            grid=(B, S // ts),
            in_specs=[pl.BlockSpec((1, ts, D), lambda b, s: (b, s, 0))],
            out_specs=pl.BlockSpec((1, ts, 1), lambda b, s: (b, s, 0)),
        ),
        compiler_params=pltpu.CompilerParams(
            dimension_semantics=("parallel", "parallel"),
            vmem_limit_bytes=vmem_limit,
        ),
    )(x)


# ----------------------------------------------------------------------------
# Pass 2: tiled Gram matrix with output-side normalization.
# ----------------------------------------------------------------------------
def _selfsim_kernel(*refs, normalize, resident, tk):
    if normalize:
        xr_ref, xc_ref, invr_ref, invc_ref, o_ref = refs
    else:
        xr_ref, xc_ref, o_ref = refs

    xi = xr_ref[0]                                            # (TQ, D)
    if resident:
        # Column panel x[b] is resident in VMEM; slice this step's (TK, D).
        start = pl.multiple_of(pl.program_id(2) * tk, tk)
        xj = xc_ref[0, pl.ds(start, tk), :]
    else:
        xj = xc_ref[0]                                        # (TK, D)

    # x_i @ x_j^T: contract both operands on D (MXU-native transposed RHS,
    # f32 accumulation; operands stay in their native dtype, no relayout).
    sim = lax.dot_general(
        xi, xj,
        dimension_numbers=(((1,), (1,)), ((), ())),
        preferred_element_type=jnp.float32,
    )                                                         # (TQ, TK) f32

    if normalize:
        sim = sim * invr_ref[0]                               # (TQ, 1) row scale
        sim = sim * invc_ref[0]                               # (1, TK) col scale

    o_ref[0] = sim.astype(o_ref.dtype)


# ----------------------------------------------------------------------------
# Generation-aware tiling / VMEM sizing.
# ----------------------------------------------------------------------------
def _vmem_capacity_bytes():
    """Physical VMEM per core; conservative fallback if the query fails."""
    try:
        return int(pltpu.get_tpu_info().vmem_capacity_bytes)
    except Exception:
        return 64 << 20   # v7x per-TensorCore VMEM (smallest current part)


def _choose_tiles(s, d, in_bytes, out_bytes, budget):
    """Pick (tq, tk, resident_col_panel) for (padded) sequence length s."""

    def footprint(tq, tk, resident):
        col = 2 * (s if resident else tk) * d * in_bytes      # double-buffered
        return (2 * tq * d * in_bytes + col
                + 2 * tq * tk * out_bytes + 2 * (tq + tk) * 4)

    if s % 128 != 0:
        # Only reachable for small S (<= 256): full-extent blocks are legal.
        return s, s, True

    # TK (output lane dim): largest 128-multiple divisor up to 2048.
    tk_cands = sorted((t for t in range(128, min(s, 2048) + 1, 128)
                       if s % t == 0), reverse=True)
    # TQ: ~256 preferred (amortizes per-step overhead, small VMEM cost).
    tq_cands = [t for t in (256, 128) if s % t == 0]

    for resident in (True, False):          # prefer the resident column panel
        for tk in tk_cands:
            for tq in tq_cands:
                if footprint(tq, tk, resident) <= budget:
                    return tq, tk, resident
    return 128, 128, False                  # last resort (huge D); streaming


def self_similarity(x, eps=1e-8, normalize=True):
    """Cosine self-similarity of x with itself: (B, S, D) -> (B, S, S)."""
    B, S, D = x.shape
    in_bytes = jnp.dtype(x.dtype).itemsize
    out_bytes = in_bytes

    cap = _vmem_capacity_bytes()
    budget = int(cap * 0.55)                # double-buffered tile budget

    # Pad S to a multiple of 128 when tiling is needed; small S (<=256) uses
    # full-extent blocks directly.  Padded rows are zero (their inv norm is
    # finite = 1/eps and their similarities are exactly 0) and sliced off.
    if S % 128 == 0 or S <= 256:
        s_pad, xp = S, x
    else:
        s_pad = ((S + 127) // 128) * 128
        xp = jnp.pad(x, ((0, 0), (0, s_pad - S), (0, 0)))

    tq, tk, resident = _choose_tiles(s_pad, D, in_bytes, out_bytes, budget)

    # Keep >= 2 grid programs so v7x's two TensorCores both get work.
    if B * (s_pad // tq) * (s_pad // tk) < 2 and tq >= 256:
        tq //= 2

    col_rows = s_pad if resident else tk
    footprint = (2 * tq * D * in_bytes + 2 * col_rows * D * in_bytes
                 + 2 * tq * tk * out_bytes + 2 * (tq + tk) * 4)
    vmem_limit = int(max(min(footprint + (12 << 20), cap - (16 << 20)),
                         32 << 20))

    kernel = functools.partial(_selfsim_kernel, normalize=normalize,
                               resident=resident, tk=tk)

    row_spec = pl.BlockSpec((1, tq, D), lambda b, i, j: (b, i, 0))
    if resident:
        # Constant (b, 0, 0) index: panel is DMA'd once per batch.
        col_spec = pl.BlockSpec((1, s_pad, D), lambda b, i, j: (b, 0, 0))
    else:
        col_spec = pl.BlockSpec((1, tk, D), lambda b, i, j: (b, j, 0))
    in_specs = [row_spec, col_spec]
    args = [xp, xp]

    if normalize:
        inv = _inv_norms(xp, eps, tq, vmem_limit)             # (B, s_pad, 1) f32
        inv_col = inv.reshape(B, 1, s_pad)                    # free lane-dense view
        in_specs += [
            pl.BlockSpec((1, tq, 1), lambda b, i, j: (b, i, 0)),   # row inv norms
            pl.BlockSpec((1, 1, tk), lambda b, i, j: (b, 0, j)),   # col inv norms
        ]
        args += [inv, inv_col]

    out = pl.pallas_call(
        kernel,
        out_shape=jax.ShapeDtypeStruct((B, s_pad, s_pad), x.dtype),
        grid_spec=pltpu.PrefetchScalarGridSpec(
            num_scalar_prefetch=0,
            grid=(B, s_pad // tq, s_pad // tk),
            in_specs=in_specs,
            out_specs=pl.BlockSpec((1, tq, tk), lambda b, i, j: (b, i, j)),
        ),
        compiler_params=pltpu.CompilerParams(
            dimension_semantics=("parallel", "parallel", "parallel"),
            vmem_limit_bytes=vmem_limit,
        ),
    )(*args)

    if s_pad != S:
        out = out[:, :S, :S]
    return out


def _reference(x, eps=1e-8, normalize=True):
    x = x.astype(jnp.float32)
    if normalize:
        norm = jnp.sqrt(jnp.sum(x * x, axis=-1, keepdims=True))
        x = x / jnp.maximum(norm, eps)
    return jnp.einsum("bsd,btd->bst", x, x)


if __name__ == "__main__":
    key = jax.random.PRNGKey(0)

    # 1) Small shape matching the module (full-extent blocks, no padding).
    B, S, D = 2, 8, 32
    x = jax.random.normal(key, (B, S, D), dtype=jnp.float32)
    out = jax.block_until_ready(self_similarity(x, eps=1e-8, normalize=True))
    ref = _reference(x)
    assert out.shape == (B, S, S), out.shape
    assert jnp.allclose(out, ref, atol=1e-5, rtol=1e-5), float(
        jnp.max(jnp.abs(out - ref)))

    # 2) Larger shape exercising the tiled grid + resident column panel.
    B2, S2, D2 = 2, 384, 64
    x2 = jax.random.normal(jax.random.PRNGKey(1), (B2, S2, D2), jnp.float32)
    out2 = jax.block_until_ready(self_similarity(x2))
    ref2 = _reference(x2)
    assert out2.shape == (B2, S2, S2), out2.shape
    assert jnp.allclose(out2, ref2, atol=1e-4, rtol=1e-4), float(
        jnp.max(jnp.abs(out2 - ref2)))

    # 3) bf16 inputs go straight to the MXU (f32 accumulation, output-side
    #    normalization: no per-step bf16 re-rounding of operands).
    x3 = x2.astype(jnp.bfloat16)
    out3 = jax.block_until_ready(self_similarity(x3))
    ref3 = _reference(x3.astype(jnp.float32))
    assert out3.dtype == jnp.bfloat16 and out3.shape == (B2, S2, S2)
    assert jnp.allclose(out3.astype(jnp.float32), ref3, atol=3e-2), float(
        jnp.max(jnp.abs(out3.astype(jnp.float32) - ref3)))

    # 4) normalize=False path (plain Gram matrix).
    out4 = jax.block_until_ready(self_similarity(x, normalize=False))
    ref4 = _reference(x, normalize=False)
    assert jnp.allclose(out4, ref4, atol=1e-4, rtol=1e-4), float(
        jnp.max(jnp.abs(out4 - ref4)))

    # 5) Non-128-multiple S > 256 exercises wrapper padding + output slicing.
    B5, S5, D5 = 1, 320, 48
    x5 = jax.random.normal(jax.random.PRNGKey(2), (B5, S5, D5), jnp.float32)
    out5 = jax.block_until_ready(self_similarity(x5))
    ref5 = _reference(x5)
    assert out5.shape == (B5, S5, S5), out5.shape
    assert jnp.allclose(out5, ref5, atol=1e-4, rtol=1e-4), float(
        jnp.max(jnp.abs(out5 - ref5)))

    print("KERNEL_OK")
</pallas_src>

<mosaic_0001>
module attributes {stable_mosaic.version = 11 : i64} {
  func.func @_inv_norm_kernel(%arg0: i32, %arg1: i32, %arg2: memref<1x8x32xf32, #tpu.memory_space<vmem>>, %arg3: memref<1x8x1xf32, #tpu.memory_space<vmem>>) attributes {dimension_semantics = [#tpu.dimension_semantics<parallel>, #tpu.dimension_semantics<parallel>], iteration_bounds = array<i64: 2, 1>, scalar_prefetch = 0 : i64, scratch_operands = 0 : i64, tpu.core_type = #tpu.core_type<tc>, window_params = [{transform_indices = @transform_0, window_bounds = array<i64: 1, 8, 32>}, {transform_indices = @transform_1, window_bounds = array<i64: 1, 8, 1>}]} {
    %c0 = arith.constant 0 : index
    %c0_0 = arith.constant 0 : index
    %c0_1 = arith.constant 0 : index
    %0 = vector.load %arg2[%c0, %c0_0, %c0_1] : memref<1x8x32xf32, #tpu.memory_space<vmem>>, vector<1x8x32xf32>
    %1 = vector.shape_cast %0 : vector<1x8x32xf32> to vector<8x32xf32>
    %2 = arith.mulf %1, %1 : vector<8x32xf32>
    %cst = arith.constant dense<0.000000e+00> : vector<8xf32>
    %3 = vector.multi_reduction <add>, %2, %cst [1] : vector<8x32xf32> to vector<8xf32>
    %4 = vector.shape_cast %3 : vector<8xf32> to vector<8x1xf32>
    %cst_2 = arith.constant 1.000000e-16 : f32
    %5 = vector.broadcast %cst_2 : f32 to vector<8x1xf32>
    %6 = arith.maximumf %4, %5 : vector<8x1xf32>
    %7 = math.rsqrt %6 : vector<8x1xf32>
    %c0_3 = arith.constant 0 : index
    %c0_4 = arith.constant 0 : index
    %c0_5 = arith.constant 0 : index
    %8 = vector.load %arg3[%c0_3, %c0_4, %c0_5] : memref<1x8x1xf32, #tpu.memory_space<vmem>>, vector<1x8x1xf32>
    %9 = vector.shape_cast %8 : vector<1x8x1xf32> to vector<8x1xf32>
    %10 = vector.shape_cast %7 : vector<8x1xf32> to vector<1x8x1xf32>
    tpu.vector_store %arg3[%c0_3, %c0_4, %c0_5], %10 {strides = array<i32>} : memref<1x8x1xf32, #tpu.memory_space<vmem>>, vector<1x8x1xf32>,
    return
  }
  func.func @transform_0(%arg0: i32, %arg1: i32) -> (i32, i32, i32) {
    %c0_i32 = arith.constant 0 : i32
    %c0_i32_0 = arith.constant 0 : i32
    return %arg0, %arg1, %c0_i32 : i32, i32, i32
  }
  func.func @transform_1(%arg0: i32, %arg1: i32) -> (i32, i32, i32) {
    %c0_i32 = arith.constant 0 : i32
    %c0_i32_0 = arith.constant 0 : i32
    return %arg0, %arg1, %c0_i32 : i32, i32, i32
  }
}

</mosaic_0001>

<llo_original>
// kernel: tpu_custom_call.1
$region0: #{tpu_custom_call.1}
  #allocation0 [shape = 'u32[]', space=smem, size = 0x4, offset = 0x4, fixed_abs, tag = 'smem constant byte address 0x4 - core index']
  #allocation1 [shape = 'u32[144,128]{1,0:T(1,128)}', space=vmem, size = 0x12000, scoped, tag = 'internal scratch']
  %s0 = inlined_call_operand.hbm [shape: f32[2,8,32], index: 0, kind: input, shape index: {}]
  %s1 = inlined_call_operand.vmem [shape: f32[2,8,1], index: 1, kind: output, shape index: {}]
  %s2 = sld [smem:[#allocation0]]
  $region41: #{tpu_custom_call.1} parent=0
    _
  %s4 = ssub.s32 1, %s2
  %s5 = scalar_select 0, %s4, %s2
  $region1: #{tpu_custom_call.1} parent=0
    #allocation2 [shape = 'u8[8192]{0}', space=vmem, size = 0x2000, scoped, tag = 'input window, operand 0']
    #allocation3 [shape = 's32[2]{0}', space=sflag, size = 0x8, scoped, tag = 'scoped memory for tpu_custom_call.1']
    %6 = vsyncpa [#allocation3], 0
    %s7 = scalar_lea.sflag [#allocation3], 1
    %8 = vsyncpa %s7, 0
    loop: start=0, step=1, limit=4
    $region2: #{tpu_custom_call.1} parent=1 // loop_pre_header
      _
    $region3: #{tpu_custom_call.1} parent=1 // loop_header
      %s10 = sphi 0, %s14
      %p11 = scmp.ge.s32.totalorder %s10, 4
      %s17 = sphi 0, %s29
      %s18 = sphi 0, %s25
      %s19 = sphi 0, %s17
      %s20 = sphi 0, %s18
      %s21 = sphi 0, %s19
      %s22 = sphi 0, %s20
      %s34 = sphi 0, %s36
      %s37 = sphi 0, %s34
      %s38 = sphi 0, %s37
      %s54 = sphi 0, %s38
      %s62 = sphi 0, %s64
      %s65 = sphi 0, %s62
      %s66 = sphi 0, %s65
      %s82 = sphi 0, %s66
    $region4: #{tpu_custom_call.1} parent=1 // loop_header_branch
      %13 = sbr.rel (%p11) target = $region8
    $region5: #{tpu_custom_call.1} parent=1 // loop_body
      %s15 = ssub.s32 %s10, 1
      %s16 = ssub.s32 %s10, 2
      %s23 = sadd.s32 1, %s18
      %p24 = scmp.ge.s32.totalorder %s23, 1
      %s25 = scalar_select %p24, 0, %s23
      %s26 = sadd.s32 1, %s17
      %s27 = scalar_select %p24, %s26, %s17
      %p28 = scmp.ge.s32.totalorder %s27, 2
      %s29 = scalar_select %p28, 0, %s27
      %s30 = ssub.s32 %s17, %s29
      %s31 = ssub.s32 %s18, %s25
      %s32 = sor.u32 %s30, %s31
      %p33 = scmp.eq.s32.totalorder %s32, 0
      %s35 = sadd.s32 %s34, 1
      %s36 = scalar_select %p33, %s34, %s35
      %p39 = pneg %p33
      %p40 = scmp.eq.s32.totalorder %s10, 1
      %p41 = por %p39, %p40
      %p42 = scmp.ne.s32.totalorder %s34, %s37
      %p43 = scmp.eq.s32.totalorder %s10, 0
      %p44 = por %p42, %p43
      %p45 = scmp.ne.s32.totalorder %s34, %s37
      %p46 = scmp.eq.s32.totalorder %s15, 1
      %p47 = por %p45, %p46
      %p48 = scmp.ne.s32.totalorder %s37, %s38
      %p49 = scmp.eq.s32.totalorder %s15, 0
      %p50 = por %p48, %p49
      %p51 = scmp.ne.s32.totalorder %s37, %s38
      %p52 = scmp.eq.s32.totalorder %s16, 1
      %p53 = por %p51, %p52
      %p55 = scmp.ne.s32.totalorder %s38, %s54
      %p56 = scmp.eq.s32.totalorder %s16, 0
      %p57 = por %p55, %p56
      %s58 = ssub.s32 %s17, %s29
      %s59 = ssub.s32 %s18, %s25
      %s60 = sor.u32 %s58, %s59
      %p61 = scmp.eq.s32.totalorder %s60, 0
      %s63 = sadd.s32 %s62, 1
      %s64 = scalar_select %p61, %s62, %s63
      %p67 = pneg %p61
      %p68 = scmp.eq.s32.totalorder %s10, 1
      %p69 = por %p67, %p68
      %p70 = scmp.ne.s32.totalorder %s62, %s65
      %p71 = scmp.eq.s32.totalorder %s10, 0
      %p72 = por %p70, %p71
      %p73 = scmp.ne.s32.totalorder %s62, %s65
      %p74 = scmp.eq.s32.totalorder %s15, 1
      %p75 = por %p73, %p74
      %p76 = scmp.ne.s32.totalorder %s65, %s66
      %p77 = scmp.eq.s32.totalorder %s15, 0
      %p78 = por %p76, %p77
      %p79 = scmp.ne.s32.totalorder %s65, %s66
      %p80 = scmp.eq.s32.totalorder %s16, 1
      %p81 = por %p79, %p80
      %p83 = scmp.ne.s32.totalorder %s66, %s82
      %p84 = scmp.eq.s32.totalorder %s16, 0
      %p85 = por %p83, %p84
      %p86 = scmp.le.s32.totalorder 1, %s10
      %p87 = scmp.lt.s32.totalorder %s10, 3
      %p88 = pnand %p86, %p87
      %p89 = pneg %p88
      // Predicated region
      $region9: #{tpu_custom_call.1} parent=5 // pred_check
        _
      $region10: #{tpu_custom_call.1} parent=5 // pred_check_branch
        %91 = sbr.rel (%p88) target = $region12
      $region11: #{tpu_custom_call.1} parent=5 // pred_region
        %s92 = ssub.s32 %s10, 1
      $region12: #{tpu_custom_call.1} parent=5 // pred_fallthru
        _
      %p93 = scmp.lt.s32.totalorder %s10, 2
      // Predicated region
      $region13: #{tpu_custom_call.1} parent=5 // pred_check
        %p94 = pneg %p93
      $region14: #{tpu_custom_call.1} parent=5 // pred_check_branch
        %96 = sbr.rel (%p94) target = $region16
      $region15: #{tpu_custom_call.1} parent=5 // pred_region
        // Predicated region
        $region17: #{tpu_custom_call.1} parent=15 // pred_check
          %p97 = pneg %p44
        $region18: #{tpu_custom_call.1} parent=15 // pred_check_branch
          %99 = sbr.rel (%p97) target = $region20
        $region19: #{tpu_custom_call.1} parent=15 // pred_region
          %s100 = sand.u32 %s34, 1
          %s101 = scalar_lea.sflag [#allocation3], %s100
          %s102 = sand.u32 %s34, 1
          %s103 = smul.addr %s102, 8
          %s104 = scalar_lea.vmem [#allocation2], %s103
          %s106 = ssub.s32 128, 128
          %107 = vsyncadd %s101, %s106
          %s108 = sadd.s32 %s18, %s17
          %s109 = smul.addr %s108, 128
          %s110 = scalar_lea.hbm %s0, %s109
          %s112 = sshll.u32 %s104, 4
          %s113 = int_to_ptr.vmem [resolvable:$true] %s112
          %115 = dma.hbm_to_vmem [thread:$0]  %s110, 128, %s113, %s101
        $region20: #{tpu_custom_call.1} parent=15 // pred_fallthru
          _
      $region16: #{tpu_custom_call.1} parent=5 // pred_fallthru
        _
      %p116 = scmp.le.s32.totalorder 1, %s10
      %p117 = scmp.lt.s32.totalorder %s10, 3
      %p118 = pnand %p116, %p117
      %p119 = pneg %p118
      // Predicated region
      $region21: #{tpu_custom_call.1} parent=5 // pred_check
        _
      $region22: #{tpu_custom_call.1} parent=5 // pred_check_branch
        %121 = sbr.rel (%p118) target = $region24
      $region23: #{tpu_custom_call.1} parent=5 // pred_region
        %s122 = ssub.s32 %s10, 1
        %s123 = sand.u32 %s37, 1
        %s124 = scalar_lea.sflag [#allocation3], %s123
        %s125 = sand.u32 %s37, 1
        %s126 = smul.addr %s125, 8
        %s127 = scalar_lea.vmem [#allocation2], %s126
        // Predicated region
        $region25: #{tpu_custom_call.1} parent=23 // pred_check
          %p128 = pneg %p50
        $region26: #{tpu_custom_call.1} parent=23 // pred_check_branch
          %130 = sbr.rel (%p128) target = $region28
        $region27: #{tpu_custom_call.1} parent=23 // pred_region
          %131 = dma.done %s124, 128
        $region28: #{tpu_custom_call.1} parent=23 // pred_fallthru
          _
        %s132 = sand.u32 %s37, 1
        %s133 = scalar_lea.sflag [#allocation3], %s132
        %s134 = sand.u32 %s37, 1
        %s135 = smul.addr %s134, 8
        %s136 = scalar_lea.vmem [#allocation2], %s135
        %p137 = pneg %p50
        %p138 = pneg %p47
        %p139 = pneg %p78
        %p140 = pneg %p75
        %p141 = scmp.lt.s32.totalorder %s19, 1
        %s142 = scalar_select %p141, %s19, 1
        %p143 = scmp.lt.s32.totalorder %s20, 0
        %s144 = scalar_select %p143, %s20, 0
        %s145 = sadd.s32 %s144, %s142
        %s146 = smul.addr %s145, 8
        %s147 = scalar_lea.vmem %s1, %s146
        %p148 = scmp.lt.s32.totalorder %s19, 1
        %s149 = scalar_select %p148, %s19, 1
        %p150 = scmp.lt.s32.totalorder %s20, 0
        %s151 = scalar_select %p150, %s20, 0
        %s152 = sadd.s32 %s151, %s149
        %s153 = smul.addr %s152, 8
        %s154 = scalar_lea.vmem %s1, %s153
        %v155 = vld [vmem:[%s127] sm:$0xff]
        %v156 = vmul.f32 %v155, %v155
        %vm157 = vcmask 261120
        %v158 = vsel %vm157, %v156, 0.0
        %159 = vadd.xlane.f32.xlu0 %v158
        %v160 = vpop.xlane.xlu0 %159
        %v161 = vmax.f32 %v160, 1e-16
        %v162 = vrsqrt.pop %v161
        %vm163 = vcmask 7168
        %164 = vst.msk [vmem:[%s154] sm:$0xff] %vm163, %v162
        %p165 = scmp.lt.s32.totalorder %s19, 1
        %s166 = scalar_select %p165, %s19, 1
        %p167 = scmp.lt.s32.totalorder %s20, 0
        %s168 = scalar_select %p167, %s20, 0
        %s169 = sadd.s32 %s168, %s166
        %s170 = smul.addr %s169, 8
        %s171 = scalar_lea.vmem %s1, %s170
        // Predicated region
        $region29: #{tpu_custom_call.1} parent=23 // pred_check
          %p172 = pneg %p75
        $region30: #{tpu_custom_call.1} parent=23 // pred_check_branch
          %174 = sbr.rel (%p172) target = $region32
        $region31: #{tpu_custom_call.1} parent=23 // pred_region
          _
        $region32: #{tpu_custom_call.1} parent=23 // pred_fallthru
          _
      $region24: #{tpu_custom_call.1} parent=5 // pred_fallthru
        _
      %p175 = scmp.le.s32.totalorder 2, %s10
      // Predicated region
      $region33: #{tpu_custom_call.1} parent=5 // pred_check
        %p176 = pneg %p175
      $region34: #{tpu_custom_call.1} parent=5 // pred_check_branch
        %178 = sbr.rel (%p176) target = $region36
      $region35: #{tpu_custom_call.1} parent=5 // pred_region
        %s179 = ssub.s32 %s10, 2
        // Predicated region
        $region37: #{tpu_custom_call.1} parent=35 // pred_check
          %p180 = pneg %p81
        $region38: #{tpu_custom_call.1} parent=35 // pred_check_branch
          %182 = sbr.rel (%p180) target = $region40
        $region39: #{tpu_custom_call.1} parent=35 // pred_region
          %p183 = scmp.lt.s32.totalorder %s21, 1
          %s184 = scalar_select %p183, %s21, 1
          %p185 = scmp.lt.s32.totalorder %s22, 0
          %s186 = scalar_select %p185, %s22, 0
          %s187 = sadd.s32 %s186, %s184
          %s188 = smul.addr %s187, 8
          %s189 = scalar_lea.vmem %s1, %s188
        $region40: #{tpu_custom_call.1} parent=35 // pred_fallthru
          _
      $region36: #{tpu_custom_call.1} parent=5 // pred_fallthru
        _
    $region6: #{tpu_custom_call.1} parent=1 // loop_footer
      %s14 = sadd.s32 1, %s10
    $region7: #{tpu_custom_call.1} parent=1 // loop_footer_branch
      %9 = sbr.rel target = $region3
    $region8: #{tpu_custom_call.1} parent=1 // loop_exit
      _
    %190 = vsyncpa [#allocation3], 1
    %s191 = scalar_lea.sflag [#allocation3], 1
    %192 = vsyncpa %s191, 1

</llo_original>
